<compile_context>
chip_gen: v5e
topology: v5e:2x2
jax: 0.10.0
libtpu: 0.0.40
codegen_flags: <defaults>
</compile_context>

<pallas_src>
import functools

import jax
import jax.numpy as jnp
from jax import lax
from jax.experimental import pallas as pl
from jax.experimental.pallas import tpu as pltpu

HID = 32    # LSTM / MLP hidden size (fixed by the module)
CIN = 3     # Conv2d in_channels
COUT = 6    # Conv2d out_channels


def _round8(n):
    return ((n + 7) // 8) * 8


# ----------------------------------------------------------------------------
# Kernel
# ----------------------------------------------------------------------------
def _actor_rnn_kernel(acts_ref, w1_ref, ws_ref, out_ref, *, N, H, W, A, AP,
                      roll_sign):
    """Fused Conv + MLP + LSTM + softmax forward for one sequence of N frames."""
    P = H * W
    NP = N * P                     # lane axis: all frames packed side by side
    R = acts_ref.shape[0]          # activation rows: [x_c0..x_c2, a_0..a_{N-1}, 0pad]
    K = 9 * R                      # conv-matmul contraction depth

    # Row offsets inside the packed weight slab (must match pack_params).
    R_W2 = 2 * HID
    R_WOUT = 3 * HID
    R_WA = 4 * HID
    R_WC = R_WA + AP
    R_B = R_WC + 8

    x8 = acts_ref[...]                                           # (R, NP)

    # ---- conv boundary masks (hoisted; iota/compare chains emitted once) ----
    lane = lax.broadcasted_iota(jnp.int32, (1, NP), 1)
    pix = lane % P
    col = pix % W
    row = pix // W
    m_top = (row > 0).astype(jnp.float32)        # dy == 0 taps need h-1 >= 0
    m_bot = (row < H - 1).astype(jnp.float32)    # dy == 2 taps need h+1 <  H
    m_lft = (col > 0).astype(jnp.float32)        # dx == 0 taps need w-1 >= 0
    m_rgt = (col < W - 1).astype(jnp.float32)    # dx == 2 taps need w+1 <  W

    # ---- 3x3 taps: lane rotations of the whole activation block -------------
    # Any value pulled across an image / frame boundary by the rotation is
    # zeroed by the masks; the action rows ride along and hit zero weight
    # columns in the conv weight matrix, so they contribute nothing.
    taps = []
    for dy in range(3):
        for dx in range(3):
            delta = (dy - 1) * W + (dx - 1)
            t = x8 if delta == 0 else pltpu.roll(
                x8, shift=(roll_sign * delta) % NP, axis=1)
            m = None
            if dy == 0:
                m = m_top
            elif dy == 2:
                m = m_bot
            if dx == 0:
                m = m_lft if m is None else m * m_lft
            elif dx == 2:
                m = m_rgt if m is None else m * m_rgt
            taps.append(t if m is None else t * m)
    tapstack = jnp.concatenate(taps, axis=0)                     # (9R, NP)

    # ---- conv as ONE MXU matmul + bias + ReLU --------------------------------
    wc = ws_ref[R_WC:R_WC + COUT, 0:K]                           # (6, 9R)
    cb = ws_ref[R_WC:R_WC + COUT, K:K + 1]                       # (6, 1) conv bias
    x1 = jnp.maximum(
        jnp.dot(wc, tapstack, preferred_element_type=jnp.float32) + cb,
        0.0)                                                     # (6, NP)

    # ---- biases --------------------------------------------------------------
    bb = ws_ref[R_B:R_B + 8, :]                                  # (8, 4*HID)
    b1 = bb[0:1, 0:HID]
    b2 = bb[1:2, 0:HID]
    ba = bb[2:3, 0:HID]
    bo = bb[3:4, 0:A]
    bl = bb[4:5, :]                                              # b_ih + b_hh [i|f|g|o]

    # ---- Linear1: frame-sliced MXU dots; h1 lands as (N, HID) directly -------
    # w1_ref[co] is the frame-replicated Linear1 weight (pack-time permutation),
    # fsel zeroes the other frame's lanes so each output row sees its own frame.
    ridx = lax.broadcasted_iota(jnp.int32, (N, NP), 0)
    lidx = lax.broadcasted_iota(jnp.int32, (N, NP), 1)
    fsel = (lidx // P == ridx).astype(jnp.float32)               # (N, NP)

    h1 = jnp.zeros((N, HID), jnp.float32)
    for co in range(COUT):
        xm = x1[co:co + 1, :] * fsel                             # (N, NP)
        h1 = h1 + jnp.dot(xm, w1_ref[co], preferred_element_type=jnp.float32)
    h1 = jnp.maximum(h1 + b1, 0.0)                               # (N, HID)

    # ---- Linear2 + Linear_a ---------------------------------------------------
    w2 = ws_ref[R_W2:R_W2 + HID, 0:HID]
    wa = ws_ref[R_WA:R_WA + AP, 0:HID]
    h2 = jnp.maximum(jnp.dot(h1, w2, preferred_element_type=jnp.float32) + b2, 0.0)
    amat = x8[CIN:CIN + N, 0:AP]                                 # (N, AP), zero padded
    ha = jnp.maximum(jnp.dot(amat, wa, preferred_element_type=jnp.float32) + ba, 0.0)
    z = h2 + ha                                                  # (N, HID) LSTM inputs

    # ---- LSTM (input projection hoisted out of the recurrence) ---------------
    wih = ws_ref[0:HID, :]                                       # (32, 128)
    whh = ws_ref[HID:2 * HID, :]                                 # (32, 128)
    gx = jnp.dot(z, wih, preferred_element_type=jnp.float32) + bl   # (N, 4*HID)

    h = jnp.zeros((1, HID), jnp.float32)
    c = jnp.zeros((1, HID), jnp.float32)
    for t in range(N):                 # static sequence length (= N frames)
        gates = gx[t:t + 1, :]
        if t > 0:
            gates = gates + jnp.dot(h, whh, preferred_element_type=jnp.float32)
        sig = jax.nn.sigmoid(gates)    # one EUP pass covers i, f, o
        tg = jnp.tanh(gates)           # one EUP pass covers g
        i_g = sig[:, 0:HID]
        f_g = sig[:, HID:2 * HID]
        g_g = tg[:, 2 * HID:3 * HID]
        o_g = sig[:, 3 * HID:4 * HID]
        c = f_g * c + i_g * g_g
        h = o_g * jnp.tanh(c)

    # ---- output head + exact softmax ------------------------------------------
    wout = ws_ref[R_WOUT:R_WOUT + HID, 0:A]
    hr = jnp.maximum(h, 0.0)                                     # ReLU(x[-1, :, :])
    logits = jnp.dot(hr, wout, preferred_element_type=jnp.float32) + bo
    mmax = jnp.max(logits, axis=-1, keepdims=True)
    e = jnp.exp(logits - mmax)
    s = jnp.sum(e, axis=-1, keepdims=True)
    out_ref[...] = e / s               # exact normalization (safe for Categorical)


# ----------------------------------------------------------------------------
# Wrapper
# ----------------------------------------------------------------------------
@functools.partial(jax.jit, static_argnames=("roll_sign",))
def actor_rnn_forward(x_nchw, a, packed, *, roll_sign=-1):
    N, C, H, W = x_nchw.shape
    assert C == CIN
    A = a.shape[1]
    P = H * W
    NP = N * P
    AP = _round8(A)
    R = _round8(CIN + N)
    assert NP % 128 == 0, "frame-packed lane axis must be a multiple of 128"
    assert 9 * R + 1 <= 4 * HID, "conv tap matrix must fit the weight slab width"

    # Wrapper-side glue: ONE small fusion that lays the frames out lane-dense
    # (channel planes of shape (CIN, N*H*W)) and appends the action rows, so
    # the kernel receives a single activation operand and does no reshaping.
    x_cm = x_nchw.astype(jnp.float32).transpose(1, 0, 2, 3).reshape(CIN, NP)
    a_rows = jnp.pad(a.astype(jnp.float32), ((0, 0), (0, NP - A)))
    pieces = [x_cm, a_rows]
    if R > CIN + N:
        pieces.append(jnp.zeros((R - CIN - N, NP), jnp.float32))
    acts = jnp.concatenate(pieces, axis=0)                       # (R, NP)

    vmem = pl.BlockSpec(memory_space=pltpu.MemorySpace.VMEM)
    kernel = functools.partial(_actor_rnn_kernel, N=N, H=H, W=W, A=A, AP=AP,
                               roll_sign=roll_sign)

    flops = 2 * (COUT * 9 * R * NP            # conv matmul
                 + COUT * NP * HID            # Linear1 (frame-sliced dots)
                 + N * HID * HID              # Linear2
                 + N * AP * HID               # Linear_a
                 + N * HID * 4 * HID          # LSTM input projection (batched)
                 + (N - 1) * HID * 4 * HID    # LSTM recurrent projection
                 + HID * A)                   # output head
    transcendentals = N * 9 * HID + A
    bytes_accessed = 4 * (acts.size + packed["w1rep"].size
                          + packed["wslab"].size + A)

    # NOTE: on v7x, batching >=2 independent rollouts over a leading "parallel"
    # grid axis would use the second TensorCore; a single sequence has no such
    # parallelism, so the call stays grid-less.
    return pl.pallas_call(
        kernel,
        out_shape=jax.ShapeDtypeStruct((1, A), jnp.float32),
        in_specs=[vmem, vmem, vmem],
        out_specs=vmem,
        cost_estimate=pl.CostEstimate(flops=flops,
                                      transcendentals=transcendentals,
                                      bytes_accessed=bytes_accessed),
    )(acts, packed["w1rep"], packed["wslab"])


# ----------------------------------------------------------------------------
# Parameters (PyTorch-equivalent shapes) and one-time packing
# ----------------------------------------------------------------------------
def init_params(key, action_dim, h, w):
    """Deterministic params with the same shapes as the PyTorch module
    (linear/LSTM weights stored transposed so every matmul is x @ w)."""
    ks = jax.random.split(key, 16)

    def u(k, shape, fan_in):
        lim = 1.0 / jnp.sqrt(jnp.float32(fan_in))
        return jax.random.uniform(k, shape, jnp.float32, -lim, lim)

    D = COUT * h * w                      # state_dim * 2
    return {
        "conv_w": u(ks[0], (COUT, CIN, 3, 3), CIN * 9),   # Conv1.weight
        "conv_b": u(ks[1], (COUT,), CIN * 9),             # Conv1.bias
        "w1":  u(ks[2], (D, HID), D),                     # Linear1.weight.T
        "b1":  u(ks[3], (1, HID), D),
        "w2":  u(ks[4], (HID, HID), HID),                 # Linear2.weight.T
        "b2":  u(ks[5], (1, HID), HID),
        "wa":  u(ks[6], (action_dim, HID), action_dim),   # Linear_a.weight.T
        "ba":  u(ks[7], (1, HID), action_dim),
        "wih": u(ks[8], (HID, 4 * HID), HID),             # LSTM.weight_ih_l0.T [i|f|g|o]
        "bih": u(ks[9], (1, 4 * HID), HID),
        "whh": u(ks[10], (HID, 4 * HID), HID),            # LSTM.weight_hh_l0.T
        "bhh": u(ks[11], (1, 4 * HID), HID),
        "wout": u(ks[12], (HID, action_dim), HID),        # out.weight.T
        "bout": u(ks[13], (1, action_dim), HID),
    }


def pack_params(p, N):
    """Pack the 16 parameter tensors into 2 kernel operands (run once, off the
    hot path).  All permutation / replication / zero padding happens here so
    the kernel reads every weight in exactly the layout its matmul wants."""
    A = p["wout"].shape[1]
    AP = _round8(A)
    R = _round8(CIN + N)
    K = 9 * R
    D = p["w1"].shape[0]
    P = D // COUT

    # Conv weights -> (COUT, 9R + 1): column k2*R + ci holds conv_w[:, ci, dy, dx]
    # with k2 = dy*3 + dx; rows ci >= CIN (the action / zero rows of the
    # activation block) get zero weight; the last column is the conv bias.
    wtap = jnp.transpose(p["conv_w"], (0, 2, 3, 1)).reshape(COUT, 9, CIN)
    wc = jnp.zeros((COUT, 9, R), jnp.float32).at[:, :, 0:CIN].set(wtap)
    wc = jnp.concatenate([wc.reshape(COUT, K), p["conv_b"].reshape(COUT, 1)],
                         axis=1)

    # Linear1 weight, frame-replicated so the kernel contracts each conv
    # channel row (both frames on the lane axis) directly:
    #   w1rep[co, n*P + p, j] = Linear1.weight.T[co*P + p, j]
    w1rep = jnp.tile(p["w1"].reshape(COUT, P, HID), (1, N, 1))

    SW = 4 * HID
    R_WC = 4 * HID + AP
    R_B = R_WC + 8
    ws = jnp.zeros((R_B + 8, SW), jnp.float32)
    ws = ws.at[0:HID, :].set(p["wih"])                     # LSTM W_ih^T
    ws = ws.at[HID:2 * HID, :].set(p["whh"])               # LSTM W_hh^T
    ws = ws.at[2 * HID:3 * HID, 0:HID].set(p["w2"])        # Linear2^T
    ws = ws.at[3 * HID:4 * HID, 0:A].set(p["wout"])        # out^T
    ws = ws.at[4 * HID:4 * HID + A, 0:HID].set(p["wa"])    # Linear_a^T (zero padded)
    ws = ws.at[R_WC:R_WC + COUT, 0:K + 1].set(wc)          # conv weight + bias
    ws = ws.at[R_B + 0, 0:HID].set(p["b1"][0])
    ws = ws.at[R_B + 1, 0:HID].set(p["b2"][0])
    ws = ws.at[R_B + 2, 0:HID].set(p["ba"][0])
    ws = ws.at[R_B + 3, 0:A].set(p["bout"][0])
    ws = ws.at[R_B + 4, :].set((p["bih"] + p["bhh"])[0])   # combined LSTM bias
    return {"w1rep": w1rep, "wslab": ws}


# ----------------------------------------------------------------------------
# Roll-direction probe (one-time, off the hot path) and pure-JAX reference
# ----------------------------------------------------------------------------
def _roll_probe_kernel(x_ref, o_ref):
    o_ref[...] = pltpu.roll(x_ref[...], shift=1, axis=1)


def detect_roll_sign():
    """Probe pltpu.roll's shift direction once so the conv taps are built with
    the correct spatial orientation on any jax version."""
    x = jnp.arange(128, dtype=jnp.float32).reshape(1, 128)
    vmem = pl.BlockSpec(memory_space=pltpu.MemorySpace.VMEM)
    r = pl.pallas_call(_roll_probe_kernel,
                       out_shape=jax.ShapeDtypeStruct((1, 128), jnp.float32),
                       in_specs=[vmem], out_specs=vmem)(x)
    # jnp.roll convention (r[1] == x[0]) -> use shift = -delta; else +delta.
    return -1 if float(r[0, 1]) == 0.0 else 1


def reference_forward(x, a, p):
    """Pure-JAX/XLA reference with the PyTorch module's exact semantics."""
    N = x.shape[0]
    y = lax.conv_general_dilated(
        x.astype(jnp.float32), p["conv_w"], window_strides=(1, 1),
        padding=((1, 1), (1, 1)), dimension_numbers=("NCHW", "OIHW", "NCHW"))
    y = jax.nn.relu(y + p["conv_b"][None, :, None, None])
    feat = y.reshape(N, -1)                       # torch.flatten(start_dim=1)
    h1 = jax.nn.relu(feat @ p["w1"] + p["b1"])
    h2 = jax.nn.relu(h1 @ p["w2"] + p["b2"])
    ha = jax.nn.relu(a @ p["wa"] + p["ba"])
    z = h2 + ha
    bl = p["bih"] + p["bhh"]
    h = jnp.zeros((1, HID), jnp.float32)
    c = jnp.zeros((1, HID), jnp.float32)
    for t in range(N):
        g = z[t:t + 1] @ p["wih"] + bl + h @ p["whh"]
        i = jax.nn.sigmoid(g[:, 0:HID])
        f = jax.nn.sigmoid(g[:, HID:2 * HID])
        gg = jnp.tanh(g[:, 2 * HID:3 * HID])
        o = jax.nn.sigmoid(g[:, 3 * HID:4 * HID])
        c = f * c + i * gg
        h = o * jnp.tanh(c)
    logits = jax.nn.relu(h) @ p["wout"] + p["bout"]
    return jax.nn.softmax(logits, axis=-1)


if __name__ == "__main__":
    # N=2 frames (== LSTM sequence length), 3x8x8 images => state_dim*2 = 384.
    N, H, W = 2, 8, 8
    action_dim = 6

    key = jax.random.PRNGKey(0)
    kx, ka, kp = jax.random.split(key, 3)
    x = jax.random.normal(kx, (N, CIN, H, W), dtype=jnp.float32)   # NCHW, like PyTorch
    a = jax.random.normal(ka, (N, action_dim), dtype=jnp.float32)

    params = init_params(kp, action_dim, H, W)
    packed = pack_params(params, N)       # one-time packing, off the hot path
    roll_sign = detect_roll_sign()        # one-time probe, off the hot path

    probs = actor_rnn_forward(x, a, packed, roll_sign=roll_sign)
    probs = jax.block_until_ready(probs)

    ref = reference_forward(x, a, params)

    assert probs.shape == (1, action_dim)
    assert bool(jnp.all(jnp.isfinite(probs)))
    assert abs(float(jnp.sum(probs)) - 1.0) < 1e-3      # exact softmax divide
    # MXU f32 matmuls use bf16 passes at default precision => loose tolerance.
    assert bool(jnp.allclose(probs, ref, atol=2e-2, rtol=2e-2))
    print("KERNEL_OK")
</pallas_src>

<mosaic_0001>
module attributes {stable_mosaic.version = 11 : i64} {
  func.func @_roll_probe_kernel(%arg0: memref<1x128xf32, #tpu.memory_space<vmem>>, %arg1: memref<1x128xf32, #tpu.memory_space<vmem>>) attributes {dimension_semantics = [], scalar_prefetch = 0 : i64, scratch_operands = 0 : i64, tpu.core_type = #tpu.core_type<tc>} {
    %c0 = arith.constant 0 : index
    %c0_0 = arith.constant 0 : index
    %0 = vector.load %arg0[%c0, %c0_0] : memref<1x128xf32, #tpu.memory_space<vmem>>, vector<1x128xf32>
    %c1_i32 = arith.constant 1 : i32
    %1 = tpu.dynamic_rotate %0 by %c1_i32 dim 1 : vector<1x128xf32>, i32 -> vector<1x128xf32>
    %c0_1 = arith.constant 0 : index
    %c0_2 = arith.constant 0 : index
    %2 = vector.load %arg1[%c0_1, %c0_2] : memref<1x128xf32, #tpu.memory_space<vmem>>, vector<1x128xf32>
    tpu.vector_store %arg1[%c0_1, %c0_2], %1 {strides = array<i32>} : memref<1x128xf32, #tpu.memory_space<vmem>>, vector<1x128xf32>,
    return
  }
}

</mosaic_0001>

<llo_original>
// kernel: tpu_custom_call.1
$region0: #{tpu_custom_call.1}
  #allocation0 [shape = 'u32[]', space=smem, size = 0x4, offset = 0x4, fixed_abs, tag = 'smem constant byte address 0x4 - core index']
  #allocation1 [shape = 'u32[72,128]{1,0:T(1,128)}', space=vmem, size = 0x9000, scoped, tag = 'internal scratch']
  %s0 = inlined_call_operand.hbm [shape: f32[1,128], index: 0, kind: input, shape index: {}]
  %s1 = inlined_call_operand.hbm [shape: f32[1,128], index: 1, kind: output, shape index: {}]
  %s2 = sld [smem:[#allocation0]]
  $region18: #{tpu_custom_call.1} parent=0
    _
  %s4 = ssub.s32 1, %s2
  %s5 = scalar_select 0, %s4, %s2
  $region1: #{tpu_custom_call.1} parent=0
    #allocation2 [shape = 'u8[512]{0}', space=vmem, size = 0x400, scoped, tag = 'input window, operand 0, single buffered']
    #allocation3 [shape = 's32[1]{0}', space=sflag, size = 0x4, scoped, tag = 'scoped memory for tpu_custom_call.1']
    #allocation4 [shape = 's32[1]{0}', space=sflag, size = 0x4, scoped, tag = 'scoped memory for tpu_custom_call.1']
    #allocation5 [shape = 'u8[512]{0}', space=vmem, size = 0x400, scoped, tag = 'output window, operand 0, single buffered']
    %6 = vsyncpa [#allocation3], 0
    %7 = vsyncpa [#allocation4], 0
    // Predicated region
    $region2: #{tpu_custom_call.1} parent=1 // pred_check
      _
    $region3: #{tpu_custom_call.1} parent=1 // pred_check_branch
      %9 = sbr.rel (0) target = $region5
    $region4: #{tpu_custom_call.1} parent=1 // pred_region
      %11 = vsyncadd [#allocation3], 0
      %s13 = sshll.u32 %s0, 4
      %s14 = int_to_ptr.hbm [resolvable:$true] %s13
      %s15 = sshll.u32 [#allocation2], 4
      %s16 = int_to_ptr.vmem [resolvable:$true] %s15
      %18 = dma.hbm_to_vmem [thread:$0]  %s14, 16, %s16, [#allocation3]
    $region5: #{tpu_custom_call.1} parent=1 // pred_fallthru
      _
    // Predicated region
    $region6: #{tpu_custom_call.1} parent=1 // pred_check
      _
    $region7: #{tpu_custom_call.1} parent=1 // pred_check_branch
      %20 = sbr.rel (0) target = $region9
    $region8: #{tpu_custom_call.1} parent=1 // pred_region
      %22 = dma.done [#allocation3], 16
    $region9: #{tpu_custom_call.1} parent=1 // pred_fallthru
      _
    %v23 = vld [vmem:[#allocation2] sm:$0x1]
    %24 = vrot.lane.b32.xlu0 %v23, 1
    %v25 = vpop.permute.xlu0 %24
    %26 = vst [vmem:[#allocation5] sm:$0x1] %v25
    // Predicated region
    $region10: #{tpu_custom_call.1} parent=1 // pred_check
      _
    $region11: #{tpu_custom_call.1} parent=1 // pred_check_branch
      %28 = sbr.rel (0) target = $region13
    $region12: #{tpu_custom_call.1} parent=1 // pred_region
      %30 = vsyncadd [#allocation4], 0
      %s32 = sshll.u32 [#allocation5], 4
      %s33 = int_to_ptr.vmem [resolvable:$true] %s32
      %s34 = sshll.u32 %s1, 4
      %s35 = int_to_ptr.hbm [resolvable:$true] %s34
      %37 = dma.vmem_to_hbm [thread:$0]  %s33, 16, %s35, [#allocation4]
    $region13: #{tpu_custom_call.1} parent=1 // pred_fallthru
      _
    // Predicated region
    $region14: #{tpu_custom_call.1} parent=1 // pred_check
      _
    $region15: #{tpu_custom_call.1} parent=1 // pred_check_branch
      %39 = sbr.rel (0) target = $region17
    $region16: #{tpu_custom_call.1} parent=1 // pred_region
      %41 = dma.done [#allocation4], 16
    $region17: #{tpu_custom_call.1} parent=1 // pred_fallthru
      _
    %42 = vsyncpa [#allocation3], 1
    %43 = vsyncpa [#allocation4], 1

</llo_original>
